<compile_context>
chip_gen: v5e
topology: v5e:2x2
jax: 0.10.0
libtpu: 0.0.40
codegen_flags: <defaults>
</compile_context>

<pallas_src>
import math
import functools

import jax
import jax.numpy as jnp
from jax.experimental import pallas as pl
from jax.experimental.pallas import tpu as pltpu

LN_EPS = 1e-5
_MAX_TILE_ROWS = 4096


def _round_up(n, m):
    return ((n + m - 1) // m) * m


def _round_down(n, m):
    return (n // m) * m


def _default_vmem_limit_bytes():
    # 3/4 of physical VMEM, capped at 96 MiB:
    #   v5e/v6e (128 MiB physical) -> 96 MiB; v7x (64 MiB per core) -> 48 MiB.
    try:
        cap = int(pltpu.get_tpu_info().vmem_capacity_bytes)
    except Exception:
        cap = 64 * 1024 * 1024          # conservative fallback (v7x per-core)
    return max(16 * 1024 * 1024, min(cap * 3 // 4, 96 * 1024 * 1024))


def spatial_embeddings_kernel(x_ref, w_ref, p_ref, o_ref, *, scale_factor,
                              matmul_dtype):
    # x_ref: (tile_rows, input_size)          native dtype
    # w_ref: (input_size, embedding_dim)      native dtype
    # p_ref: (8, embedding_dim) f32           row0=bias, row1=gamma, row2=beta
    # o_ref: (tile_rows, embedding_dim)
    x = x_ref[...]
    w = w_ref[...]
    if matmul_dtype is not None:
        # bf16 operands -> exact bf16 products on the MXU, f32 accumulation.
        x = x.astype(matmul_dtype)
        w = w.astype(matmul_dtype)
    y = jnp.dot(x, w, preferred_element_type=jnp.float32)
    y = y + p_ref[0:1, :]

    # LayerNorm over embedding_dim (eval-mode MaskedNorm('layer') ignores mask).
    mean = jnp.mean(y, axis=-1, keepdims=True)
    centered = y - mean
    var = jnp.mean(centered * centered, axis=-1, keepdims=True)
    y = centered * jax.lax.rsqrt(var + LN_EPS)
    y = y * p_ref[1:2, :] + p_ref[2:3, :]

    # Softsign (exact) + transformer scale.
    y = y / (1.0 + jnp.abs(y))
    o_ref[...] = (y * scale_factor).astype(o_ref.dtype)


def spatial_embeddings(x, mask, w_t, b, gamma, beta, *, scale_factor,
                       tile_rows=None, matmul_dtype=jnp.bfloat16,
                       vmem_limit_bytes=None, single_buffer_params=True):
    """x: (B, T, input_size); mask: (B, T) — unused by eval-mode layer norm.
    w_t: (input_size, E) (nn.Linear weight, transposed); b/gamma/beta: (E,)."""
    del mask  # MaskedNorm('layer') in eval mode ignores the mask.
    # TODO(synk): training-mode MaskedNorm (masked_select/scatter statistics)
    # and the multimodal branch are not implemented; this is the eval forward.
    B, T, input_size = x.shape
    embedding_dim = w_t.shape[1]
    rows = B * T
    x2d = x.reshape(rows, input_size)

    # Stack linear bias + LN affine params into one (8, E) f32 slab:
    # one DMA descriptor / one buffer reservation instead of three.
    params = jnp.zeros((8, embedding_dim), jnp.float32)
    params = params.at[0].set(b.astype(jnp.float32))
    params = params.at[1].set(gamma.astype(jnp.float32))
    params = params.at[2].set(beta.astype(jnp.float32))

    if vmem_limit_bytes is None:
        vmem_limit_bytes = _default_vmem_limit_bytes()

    in_bytes = jnp.dtype(x.dtype).itemsize
    out_bytes = in_bytes
    row_mult = 8 if in_bytes >= 4 else (16 if in_bytes == 2 else 32)
    cast_bytes = 0 if matmul_dtype is None else jnp.dtype(matmul_dtype).itemsize

    if tile_rows is None:
        # Largest row tile fitting the VMEM limit: double-buffered x/out tiles,
        # f32 working set, in-kernel bf16 cast copies, plus fixed param slabs.
        per_row = (2 * input_size * in_bytes
                   + 2 * embedding_dim * out_bytes
                   + 4 * embedding_dim * 4
                   + input_size * cast_bytes)
        n_wbuf = 1 if single_buffer_params else 2
        fixed = (n_wbuf * input_size * embedding_dim * w_t.dtype.itemsize
                 + input_size * embedding_dim * cast_bytes
                 + n_wbuf * 8 * embedding_dim * 4
                 + 4 * 1024 * 1024)      # compiler scratch / values headroom
        tile_rows = (int(vmem_limit_bytes) - fixed) // per_row
        tile_rows = min(_MAX_TILE_ROWS, tile_rows)

    tile_rows = max(row_mult, _round_down(int(tile_rows), row_mult))
    if rows <= row_mult:
        # Tiny input: one block equal to the full row extent (valid block shape
        # because it equals the full array dim).
        tile_rows = rows
    else:
        # Keep >= 2 grid steps so both v7x TensorCores get work on the
        # "parallel" axis; also guarantees block rows <= array rows.
        tile_rows = min(tile_rows, _round_up(-(-rows // 2), row_mult))

    grid = (pl.cdiv(rows, tile_rows),)
    kernel = functools.partial(spatial_embeddings_kernel,
                               scale_factor=float(scale_factor),
                               matmul_dtype=matmul_dtype)

    def _call(use_single_buffer):
        const_kwargs = ({"pipeline_mode": pl.Buffered(1)}
                        if use_single_buffer else {})
        in_specs = [
            pl.BlockSpec((tile_rows, input_size), lambda i: (i, 0)),
            pl.BlockSpec((input_size, embedding_dim), lambda i: (0, 0),
                         **const_kwargs),
            pl.BlockSpec((8, embedding_dim), lambda i: (0, 0), **const_kwargs),
        ]
        out = pl.pallas_call(
            kernel,
            out_shape=jax.ShapeDtypeStruct((rows, embedding_dim), x.dtype),
            grid=grid,
            in_specs=in_specs,
            out_specs=pl.BlockSpec((tile_rows, embedding_dim),
                                   lambda i: (i, 0)),
            compiler_params=pltpu.CompilerParams(
                dimension_semantics=("parallel",),
                vmem_limit_bytes=int(vmem_limit_bytes)),
        )(x2d, w_t, params)
        return jax.block_until_ready(out)

    if single_buffer_params:
        try:
            out2d = _call(True)
        except Exception:
            # pipeline_mode=Buffered(1) unsupported on this backend/version:
            # fall back to default double-buffered constant operands.
            out2d = _call(False)
    else:
        out2d = _call(False)

    return out2d.reshape(B, T, embedding_dim)


def reference(x, w_t, b, gamma, beta, scale_factor, matmul_dtype=jnp.bfloat16):
    # Pure-JAX reference with the same matmul precision treatment as the
    # kernel (bf16 operands, f32 accumulation).
    xm = x if matmul_dtype is None else x.astype(matmul_dtype)
    wm = w_t if matmul_dtype is None else w_t.astype(matmul_dtype)
    y = jnp.einsum("btf,fe->bte", xm, wm,
                   preferred_element_type=jnp.float32) + b.astype(jnp.float32)
    mean = jnp.mean(y, axis=-1, keepdims=True)
    var = jnp.mean((y - mean) ** 2, axis=-1, keepdims=True)
    y = (y - mean) * jax.lax.rsqrt(var + LN_EPS) * gamma + beta
    y = y / (1.0 + jnp.abs(y))
    return y * scale_factor


if __name__ == "__main__":
    B, T = 2, 37                 # rows = 74 -> exercises the ragged last block
    input_size = 64
    embedding_dim = 128          # multiple of 128 -> lane-dense output stores
    scale_factor = math.sqrt(embedding_dim)

    key = jax.random.PRNGKey(0)
    k_x, k_w, k_b = jax.random.split(key, 3)

    x = jax.random.normal(k_x, (B, T, input_size), dtype=jnp.float32)
    mask = jnp.ones((B, T), dtype=jnp.float32)

    # nn.Linear-style init (uniform +/- 1/sqrt(fan_in)); weight stored
    # transposed as (input_size, embedding_dim).
    bound = 1.0 / math.sqrt(input_size)
    w_t = jax.random.uniform(k_w, (input_size, embedding_dim),
                             minval=-bound, maxval=bound, dtype=jnp.float32)
    b = jax.random.uniform(k_b, (embedding_dim,),
                           minval=-bound, maxval=bound, dtype=jnp.float32)
    # nn.LayerNorm default affine params.
    gamma = jnp.ones((embedding_dim,), dtype=jnp.float32)
    beta = jnp.zeros((embedding_dim,), dtype=jnp.float32)

    ref = reference(x, w_t, b, gamma, beta, scale_factor)

    # Auto-tiled path (>=2 grid steps, ragged last block, no wrapper pad).
    out = spatial_embeddings(x, mask, w_t, b, gamma, beta,
                             scale_factor=scale_factor)
    out = jax.block_until_ready(out)
    assert out.shape == (B, T, embedding_dim)
    assert jnp.allclose(out, ref, atol=1e-3, rtol=1e-3), \
        float(jnp.max(jnp.abs(out - ref)))

    # Forced small tile: multi-step grid + ragged last block path.
    out_small = spatial_embeddings(x, mask, w_t, b, gamma, beta,
                                   scale_factor=scale_factor, tile_rows=32)
    out_small = jax.block_until_ready(out_small)
    assert jnp.allclose(out_small, ref, atol=1e-3, rtol=1e-3), \
        float(jnp.max(jnp.abs(out_small - ref)))

    print("KERNEL_OK")
</pallas_src>

<mosaic_0001>
module attributes {stable_mosaic.version = 11 : i64} {
  func.func @spatial_embeddings_kernel(%arg0: i32, %arg1: memref<40x64xf32, #tpu.memory_space<vmem>>, %arg2: memref<64x128xf32, #tpu.memory_space<vmem>>, %arg3: memref<8x128xf32, #tpu.memory_space<vmem>>, %arg4: memref<40x128xf32, #tpu.memory_space<vmem>>) attributes {dimension_semantics = [#tpu.dimension_semantics<parallel>], iteration_bounds = array<i64: 2>, scalar_prefetch = 0 : i64, scratch_operands = 0 : i64, tpu.core_type = #tpu.core_type<tc>, window_params = [{transform_indices = @transform_0, window_bounds = array<i64: 40, 64>}, {pipeline_mode = #tpu.pipeline_mode<synchronous>, transform_indices = @transform_1, window_bounds = array<i64: 64, 128>}, {pipeline_mode = #tpu.pipeline_mode<synchronous>, transform_indices = @transform_2, window_bounds = array<i64: 8, 128>}, {transform_indices = @transform_3, window_bounds = array<i64: 40, 128>}]} {
    %c0 = arith.constant 0 : index
    %c0_0 = arith.constant 0 : index
    %0 = vector.load %arg1[%c0, %c0_0] : memref<40x64xf32, #tpu.memory_space<vmem>>, vector<40x64xf32>
    %c0_1 = arith.constant 0 : index
    %c0_2 = arith.constant 0 : index
    %1 = vector.load %arg2[%c0_1, %c0_2] : memref<64x128xf32, #tpu.memory_space<vmem>>, vector<64x128xf32>
    %2 = arith.truncf %0 : vector<40x64xf32> to vector<40x64xbf16>
    %3 = arith.truncf %1 : vector<64x128xf32> to vector<64x128xbf16>
    %cst = arith.constant dense<0.000000e+00> : vector<40x128xf32>
    %4 = tpu.matmul %2, %3, %cst {dimension_numbers = #tpu.dot_dimension_numbers<[1], [0], [0], [1], [0, 0, 1, 1], [], []>} : vector<40x64xbf16>, vector<64x128xbf16>, vector<40x128xf32> -> vector<40x128xf32>
    %c0_3 = arith.constant 0 : index
    %c0_4 = arith.constant 0 : index
    %5 = vector.load %arg3[%c0_3, %c0_4] : memref<8x128xf32, #tpu.memory_space<vmem>>, vector<1x128xf32>
    %6 = vector.broadcast %5 : vector<1x128xf32> to vector<40x128xf32>
    %7 = arith.addf %4, %6 : vector<40x128xf32>
    %cst_5 = arith.constant dense<0.000000e+00> : vector<40xf32>
    %8 = vector.multi_reduction <add>, %7, %cst_5 [1] : vector<40x128xf32> to vector<40xf32>
    %9 = vector.shape_cast %8 : vector<40xf32> to vector<40x1xf32>
    %cst_6 = arith.constant 1.280000e+02 : f32
    %10 = vector.broadcast %cst_6 : f32 to vector<40x1xf32>
    %11 = arith.divf %9, %10 : vector<40x1xf32>
    %12 = vector.broadcast %11 : vector<40x1xf32> to vector<40x128xf32>
    %13 = arith.subf %7, %12 : vector<40x128xf32>
    %14 = arith.mulf %13, %13 : vector<40x128xf32>
    %cst_7 = arith.constant dense<0.000000e+00> : vector<40xf32>
    %15 = vector.multi_reduction <add>, %14, %cst_7 [1] : vector<40x128xf32> to vector<40xf32>
    %16 = vector.shape_cast %15 : vector<40xf32> to vector<40x1xf32>
    %cst_8 = arith.constant 1.280000e+02 : f32
    %17 = vector.broadcast %cst_8 : f32 to vector<40x1xf32>
    %18 = arith.divf %16, %17 : vector<40x1xf32>
    %cst_9 = arith.constant 9.99999974E-6 : f32
    %19 = vector.broadcast %cst_9 : f32 to vector<40x1xf32>
    %20 = arith.addf %18, %19 : vector<40x1xf32>
    %21 = math.rsqrt %20 : vector<40x1xf32>
    %22 = vector.broadcast %21 : vector<40x1xf32> to vector<40x128xf32>
    %23 = arith.mulf %13, %22 : vector<40x128xf32>
    %c1 = arith.constant 1 : index
    %c0_10 = arith.constant 0 : index
    %24 = vector.load %arg3[%c1, %c0_10] : memref<8x128xf32, #tpu.memory_space<vmem>>, vector<1x128xf32>
    %25 = vector.broadcast %24 : vector<1x128xf32> to vector<40x128xf32>
    %26 = arith.mulf %23, %25 : vector<40x128xf32>
    %c2 = arith.constant 2 : index
    %c0_11 = arith.constant 0 : index
    %27 = vector.load %arg3[%c2, %c0_11] : memref<8x128xf32, #tpu.memory_space<vmem>>, vector<1x128xf32>
    %28 = vector.broadcast %27 : vector<1x128xf32> to vector<40x128xf32>
    %29 = arith.addf %26, %28 : vector<40x128xf32>
    %30 = math.absf %29 : vector<40x128xf32>
    %cst_12 = arith.constant 1.000000e+00 : f32
    %31 = vector.broadcast %cst_12 : f32 to vector<40x128xf32>
    %32 = arith.addf %31, %30 : vector<40x128xf32>
    %33 = arith.divf %29, %32 : vector<40x128xf32>
    %cst_13 = arith.constant 11.3137083 : f32
    %34 = vector.broadcast %cst_13 : f32 to vector<40x128xf32>
    %35 = arith.mulf %33, %34 : vector<40x128xf32>
    %c0_14 = arith.constant 0 : index
    %c0_15 = arith.constant 0 : index
    %36 = vector.load %arg4[%c0_14, %c0_15] : memref<40x128xf32, #tpu.memory_space<vmem>>, vector<40x128xf32>
    tpu.vector_store %arg4[%c0_14, %c0_15], %35 {strides = array<i32>} : memref<40x128xf32, #tpu.memory_space<vmem>>, vector<40x128xf32>,
    return
  }
  func.func @transform_0(%arg0: i32) -> (i32, i32) {
    %c0_i32 = arith.constant 0 : i32
    %c0_i32_0 = arith.constant 0 : i32
    return %arg0, %c0_i32 : i32, i32
  }
  func.func @transform_1(%arg0: i32) -> (i32, i32) {
    %c0_i32 = arith.constant 0 : i32
    %c0_i32_0 = arith.constant 0 : i32
    %c0_i32_1 = arith.constant 0 : i32
    return %c0_i32, %c0_i32_0 : i32, i32
  }
  func.func @transform_2(%arg0: i32) -> (i32, i32) {
    %c0_i32 = arith.constant 0 : i32
    %c0_i32_0 = arith.constant 0 : i32
    %c0_i32_1 = arith.constant 0 : i32
    return %c0_i32, %c0_i32_0 : i32, i32
  }
  func.func @transform_3(%arg0: i32) -> (i32, i32) {
    %c0_i32 = arith.constant 0 : i32
    %c0_i32_0 = arith.constant 0 : i32
    return %arg0, %c0_i32 : i32, i32
  }
}

module attributes {stable_mosaic.version = 11 : i64} {
  func.func @spatial_embeddings_kernel(%arg0: i32, %arg1: memref<40x64xf32, #tpu.memory_space<vmem>>, %arg2: memref<64x128xf32, #tpu.memory_space<vmem>>, %arg3: memref<8x128xf32, #tpu.memory_space<vmem>>, %arg4: memref<40x128xf32, #tpu.memory_space<vmem>>) attributes {dimension_semantics = [#tpu.dimension_semantics<parallel>], iteration_bounds = array<i64: 2>, scalar_prefetch = 0 : i64, scratch_operands = 0 : i64, tpu.core_type = #tpu.core_type<tc>, window_params = [{transform_indices = @transform_0, window_bounds = array<i64: 40, 64>}, {pipeline_mode = #tpu.pipeline_mode<synchronous>, transform_indices = @transform_1, window_bounds = array<i64: 64, 128>}, {pipeline_mode = #tpu.pipeline_mode<synchronous>, transform_indices = @transform_2, window_bounds = array<i64: 8, 128>}, {transform_indices = @transform_3, window_bounds = array<i64: 40, 128>}]} {
    %c0 = arith.constant 0 : index
    %c0_0 = arith.constant 0 : index
    %0 = vector.load %arg1[%c0, %c0_0] : memref<40x64xf32, #tpu.memory_space<vmem>>, vector<40x64xf32>
    %c0_1 = arith.constant 0 : index
    %c0_2 = arith.constant 0 : index
    %1 = vector.load %arg2[%c0_1, %c0_2] : memref<64x128xf32, #tpu.memory_space<vmem>>, vector<64x128xf32>
    %2 = arith.truncf %0 : vector<40x64xf32> to vector<40x64xbf16>
    %3 = arith.truncf %1 : vector<64x128xf32> to vector<64x128xbf16>
    %cst = arith.constant dense<0.000000e+00> : vector<40x128xf32>
    %4 = tpu.matmul %2, %3, %cst {dimension_numbers = #tpu.dot_dimension_numbers<[1], [0], [0], [1], [0, 0, 1, 1], [], []>} : vector<40x64xbf16>, vector<64x128xbf16>, vector<40x128xf32> -> vector<40x128xf32>
    %c0_3 = arith.constant 0 : index
    %c0_4 = arith.constant 0 : index
    %5 = vector.load %arg3[%c0_3, %c0_4] : memref<8x128xf32, #tpu.memory_space<vmem>>, vector<1x128xf32>
    %6 = vector.broadcast %5 : vector<1x128xf32> to vector<40x128xf32>
    %7 = arith.addf %4, %6 : vector<40x128xf32>
    %cst_5 = arith.constant dense<0.000000e+00> : vector<40xf32>
    %8 = vector.multi_reduction <add>, %7, %cst_5 [1] : vector<40x128xf32> to vector<40xf32>
    %9 = vector.shape_cast %8 : vector<40xf32> to vector<40x1xf32>
    %cst_6 = arith.constant 1.280000e+02 : f32
    %10 = vector.broadcast %cst_6 : f32 to vector<40x1xf32>
    %11 = arith.divf %9, %10 : vector<40x1xf32>
    %12 = vector.broadcast %11 : vector<40x1xf32> to vector<40x128xf32>
    %13 = arith.subf %7, %12 : vector<40x128xf32>
    %14 = arith.mulf %13, %13 : vector<40x128xf32>
    %cst_7 = arith.constant dense<0.000000e+00> : vector<40xf32>
    %15 = vector.multi_reduction <add>, %14, %cst_7 [1] : vector<40x128xf32> to vector<40xf32>
    %16 = vector.shape_cast %15 : vector<40xf32> to vector<40x1xf32>
    %cst_8 = arith.constant 1.280000e+02 : f32
    %17 = vector.broadcast %cst_8 : f32 to vector<40x1xf32>
    %18 = arith.divf %16, %17 : vector<40x1xf32>
    %cst_9 = arith.constant 9.99999974E-6 : f32
    %19 = vector.broadcast %cst_9 : f32 to vector<40x1xf32>
    %20 = arith.addf %18, %19 : vector<40x1xf32>
    %21 = math.rsqrt %20 : vector<40x1xf32>
    %22 = vector.broadcast %21 : vector<40x1xf32> to vector<40x128xf32>
    %23 = arith.mulf %13, %22 : vector<40x128xf32>
    %c1 = arith.constant 1 : index
    %c0_10 = arith.constant 0 : index
    %24 = vector.load %arg3[%c1, %c0_10] : memref<8x128xf32, #tpu.memory_space<vmem>>, vector<1x128xf32>
    %25 = vector.broadcast %24 : vector<1x128xf32> to vector<40x128xf32>
    %26 = arith.mulf %23, %25 : vector<40x128xf32>
    %c2 = arith.constant 2 : index
    %c0_11 = arith.constant 0 : index
    %27 = vector.load %arg3[%c2, %c0_11] : memref<8x128xf32, #tpu.memory_space<vmem>>, vector<1x128xf32>
    %28 = vector.broadcast %27 : vector<1x128xf32> to vector<40x128xf32>
    %29 = arith.addf %26, %28 : vector<40x128xf32>
    %30 = math.absf %29 : vector<40x128xf32>
    %cst_12 = arith.constant 1.000000e+00 : f32
    %31 = vector.broadcast %cst_12 : f32 to vector<40x128xf32>
    %32 = arith.addf %31, %30 : vector<40x128xf32>
    %33 = arith.divf %29, %32 : vector<40x128xf32>
    %cst_13 = arith.constant 11.3137083 : f32
    %34 = vector.broadcast %cst_13 : f32 to vector<40x128xf32>
    %35 = arith.mulf %33, %34 : vector<40x128xf32>
    %c0_14 = arith.constant 0 : index
    %c0_15 = arith.constant 0 : index
    %36 = vector.load %arg4[%c0_14, %c0_15] : memref<40x128xf32, #tpu.memory_space<vmem>>, vector<40x128xf32>
    tpu.vector_store %arg4[%c0_14, %c0_15], %35 {strides = array<i32>} : memref<40x128xf32, #tpu.memory_space<vmem>>, vector<40x128xf32>,
    return
  }
  func.func @transform_0(%arg0: i32) -> (i32, i32) {
    %c0_i32 = arith.constant 0 : i32
    %c0_i32_0 = arith.constant 0 : i32
    return %arg0, %c0_i32 : i32, i32
  }
  func.func @transform_1(%arg0: i32) -> (i32, i32) {
    %c0_i32 = arith.constant 0 : i32
    %c0_i32_0 = arith.constant 0 : i32
    %c0_i32_1 = arith.constant 0 : i32
    return %c0_i32, %c0_i32_0 : i32, i32
  }
  func.func @transform_2(%arg0: i32) -> (i32, i32) {
    %c0_i32 = arith.constant 0 : i32
    %c0_i32_0 = arith.constant 0 : i32
    %c0_i32_1 = arith.constant 0 : i32
    return %c0_i32, %c0_i32_0 : i32, i32
  }
  func.func @transform_3(%arg0: i32) -> (i32, i32) {
    %c0_i32 = arith.constant 0 : i32
    %c0_i32_0 = arith.constant 0 : i32
    return %arg0, %c0_i32 : i32, i32
  }
}

</mosaic_0001>

<llo_original>
// kernel: tpu_custom_call.1
$region0: #{tpu_custom_call.1}
  #allocation0 [shape = 'u32[]', space=smem, size = 0x4, offset = 0x4, fixed_abs, tag = 'smem constant byte address 0x4 - core index']
  #allocation1 [shape = 'u32[72,128]{1,0:T(1,128)}', space=vmem, size = 0x9000, scoped, tag = 'internal scratch']
  %s0 = inlined_call_operand.vmem [shape: f32[74,64], index: 0, kind: input, shape index: {}]
  %s1 = inlined_call_operand.vmem [shape: f32[64,128], index: 1, kind: input, shape index: {}]
  %s2 = inlined_call_operand.vmem [shape: f32[8,128], index: 2, kind: input, shape index: {}]
  %s3 = inlined_call_operand.hbm [shape: f32[74,128], index: 3, kind: output, shape index: {}]
  %s4 = sld [smem:[#allocation0]]
  $region45: #{tpu_custom_call.1} parent=0
    _
  %s6 = ssub.s32 1, %s4
  %s7 = scalar_select 0, %s6, %s4
  $region1: #{tpu_custom_call.1} parent=0
    #allocation2 [shape = 'u8[40960]{0}', space=vmem, size = 0xa000, scoped, tag = 'output window, operand 0']
    #allocation3 [shape = 's32[2]{0}', space=sflag, size = 0x8, scoped, tag = 'scoped memory for tpu_custom_call.1']
    %8 = vsyncpa [#allocation3], 0
    %s9 = scalar_lea.sflag [#allocation3], 1
    %10 = vsyncpa %s9, 0
    loop: start=0, step=1, limit=4
    $region2: #{tpu_custom_call.1} parent=1 // loop_pre_header
      _
    $region3: #{tpu_custom_call.1} parent=1 // loop_header
      %s12 = sphi 0, %s16
      %p13 = scmp.ge.s32.totalorder %s12, 4
      %s22 = sphi 0, %s24
      %s25 = sphi 0, %s22
      %s26 = sphi 0, %s25
      %s42 = sphi 0, %s26
      %s46 = sphi 0, %s46
      %s48 = sphi 0, %s46
      %s49 = sphi 0, %s48
      %s63 = sphi 0, %s49
      %s67 = sphi 0, %s67
      %s69 = sphi 0, %s67
      %s70 = sphi 0, %s69
      %s84 = sphi 0, %s70
      %s90 = sphi 0, %s92
      %s93 = sphi 0, %s90
      %s94 = sphi 0, %s93
      %s110 = sphi 0, %s94
    $region4: #{tpu_custom_call.1} parent=1 // loop_header_branch
      %15 = sbr.rel (%p13) target = $region8
    $region5: #{tpu_custom_call.1} parent=1 // loop_body
      %s17 = ssub.s32 %s12, 1
      %s18 = ssub.s32 %s12, 2
      %s19 = sadd.s32 %s12, 1
      %s20 = ssub.s32 %s12, %s19
      %p21 = scmp.eq.s32.totalorder %s20, 0
      %s23 = sadd.s32 %s22, 1
      %s24 = scalar_select %p21, %s22, %s23
      %p27 = pneg %p21
      %p28 = scmp.eq.s32.totalorder %s12, 1
      %p29 = por %p27, %p28
      %p30 = scmp.ne.s32.totalorder %s22, %s25
      %p31 = scmp.eq.s32.totalorder %s12, 0
      %p32 = por %p30, %p31
      %p33 = scmp.ne.s32.totalorder %s22, %s25
      %p34 = scmp.eq.s32.totalorder %s17, 1
      %p35 = por %p33, %p34
      %p36 = scmp.ne.s32.totalorder %s25, %s26
      %p37 = scmp.eq.s32.totalorder %s17, 0
      %p38 = por %p36, %p37
      %p39 = scmp.ne.s32.totalorder %s25, %s26
      %p40 = scmp.eq.s32.totalorder %s18, 1
      %p41 = por %p39, %p40
      %p43 = scmp.ne.s32.totalorder %s26, %s42
      %p44 = scmp.eq.s32.totalorder %s18, 0
      %p45 = por %p43, %p44
      %s47 = sadd.s32 %s46, 1
      %p50 = scmp.eq.s32.totalorder %s12, 1
      %p51 = scmp.ne.s32.totalorder %s46, %s48
      %p52 = scmp.eq.s32.totalorder %s12, 0
      %p53 = por %p51, %p52
      %p54 = scmp.ne.s32.totalorder %s46, %s48
      %p55 = scmp.eq.s32.totalorder %s17, 1
      %p56 = por %p54, %p55
      %p57 = scmp.ne.s32.totalorder %s48, %s49
      %p58 = scmp.eq.s32.totalorder %s17, 0
      %p59 = por %p57, %p58
      %p60 = scmp.ne.s32.totalorder %s48, %s49
      %p61 = scmp.eq.s32.totalorder %s18, 1
      %p62 = por %p60, %p61
      %p64 = scmp.ne.s32.totalorder %s49, %s63
      %p65 = scmp.eq.s32.totalorder %s18, 0
      %p66 = por %p64, %p65
      %s68 = sadd.s32 %s67, 1
      %p71 = scmp.eq.s32.totalorder %s12, 1
      %p72 = scmp.ne.s32.totalorder %s67, %s69
      %p73 = scmp.eq.s32.totalorder %s12, 0
      %p74 = por %p72, %p73
      %p75 = scmp.ne.s32.totalorder %s67, %s69
      %p76 = scmp.eq.s32.totalorder %s17, 1
      %p77 = por %p75, %p76
      %p78 = scmp.ne.s32.totalorder %s69, %s70
      %p79 = scmp.eq.s32.totalorder %s17, 0
      %p80 = por %p78, %p79
      %p81 = scmp.ne.s32.totalorder %s69, %s70
      %p82 = scmp.eq.s32.totalorder %s18, 1
      %p83 = por %p81, %p82
      %p85 = scmp.ne.s32.totalorder %s70, %s84
      %p86 = scmp.eq.s32.totalorder %s18, 0
      %p87 = por %p85, %p86
      %s88 = ssub.s32 %s12, %s19
      %p89 = scmp.eq.s32.totalorder %s88, 0
      %s91 = sadd.s32 %s90, 1
      %s92 = scalar_select %p89, %s90, %s91
      %p95 = pneg %p89
      %p96 = scmp.eq.s32.totalorder %s12, 1
      %p97 = por %p95, %p96
      %p98 = scmp.ne.s32.totalorder %s90, %s93
      %p99 = scmp.eq.s32.totalorder %s12, 0
      %p100 = por %p98, %p99
      %p101 = scmp.ne.s32.totalorder %s90, %s93
      %p102 = scmp.eq.s32.totalorder %s17, 1
      %p103 = por %p101, %p102
      %p104 = scmp.ne.s32.totalorder %s93, %s94
      %p105 = scmp.eq.s32.totalorder %s17, 0
      %p106 = por %p104, %p105
      %p107 = scmp.ne.s32.totalorder %s93, %s94
      %p108 = scmp.eq.s32.totalorder %s18, 1
      %p109 = por %p107, %p108
      %p111 = scmp.ne.s32.totalorder %s94, %s110
      %p112 = scmp.eq.s32.totalorder %s18, 0
      %p113 = por %p111, %p112
      %p114 = scmp.le.s32.totalorder 1, %s12
      %p115 = scmp.lt.s32.totalorder %s12, 3
      %p116 = pnand %p114, %p115
      %p117 = pneg %p116
      // Predicated region
      $region9: #{tpu_custom_call.1} parent=5 // pred_check
        _
      $region10: #{tpu_custom_call.1} parent=5 // pred_check_branch
        %119 = sbr.rel (%p116) target = $region12
      $region11: #{tpu_custom_call.1} parent=5 // pred_region
        %s120 = ssub.s32 %s12, 1
        // Predicated region
        $region13: #{tpu_custom_call.1} parent=11 // pred_check
          %p121 = pneg %p59
        $region14: #{tpu_custom_call.1} parent=11 // pred_check_branch
          %123 = sbr.rel (%p121) target = $region16
        $region15: #{tpu_custom_call.1} parent=11 // pred_region
          _
        $region16: #{tpu_custom_call.1} parent=11 // pred_fallthru
          _
        // Predicated region
        $region17: #{tpu_custom_call.1} parent=11 // pred_check
          %p124 = pneg %p80
        $region18: #{tpu_custom_call.1} parent=11 // pred_check_branch
          %126 = sbr.rel (%p124) target = $region20
        $region19: #{tpu_custom_call.1} parent=11 // pred_region
          _
        $region20: #{tpu_custom_call.1} parent=11 // pred_fallthru
          _
      $region12: #{tpu_custom_call.1} parent=5 // pred_fallthru
        _
      %p127 = scmp.lt.s32.totalorder %s12, 2
      // Predicated region
      $region21: #{tpu_custom_call.1} parent=5 // pred_check
        %p128 = pneg %p127
      $region22: #{tpu_custom_call.1} parent=5 // pred_check_branch
        %130 = sbr.rel (%p128) target = $region24
      $region23: #{tpu_custom_call.1} parent=5 // pred_region
        // Predicated region
        $region25: #{tpu_custom_call.1} parent=23 // pred_check
          %p131 = pneg %p32
        $region26: #{tpu_custom_call.1} parent=23 // pred_check_branch
          %133 = sbr.rel (%p131) target = $region28
        $region27: #{tpu_custom_call.1} parent=23 // pred_region
          %s134 = smul.u32 5, %s12
          %p135 = scmp.lt.s32.totalorder %s134, 9
          %s136 = scalar_select %p135, %s134, 9
          %s137 = smul.addr %s136, 8
          %s138 = scalar_lea.vmem %s0, %s137
          %s139 = smul.u32 5, %s12
        $region28: #{tpu_custom_call.1} parent=23 // pred_fallthru
          _
      $region24: #{tpu_custom_call.1} parent=5 // pred_fallthru
        _
      %p140 = scmp.le.s32.totalorder 1, %s12
      %p141 = scmp.lt.s32.totalorder %s12, 3
      %p142 = pnand %p140, %p141
      %p143 = pneg %p142
      // Predicated region
      $region29: #{tpu_custom_call.1} parent=5 // pred_check
        _
      $region30: #{tpu_custom_call.1} parent=5 // pred_check_branch
        %145 = sbr.rel (%p142) target = $region32
      $region31: #{tpu_custom_call.1} parent=5 // pred_region
        %s146 = ssub.s32 %s12, 1
        %s147 = smul.u32 5, %s17
        %p148 = scmp.lt.s32.totalorder %s147, 9
        %s149 = scalar_select %p148, %s147, 9
        %s150 = smul.addr %s149, 8
        %s151 = scalar_lea.vmem %s0, %s150
        %p152 = pneg %p38
        %p153 = pneg %p35
        %p154 = pneg %p59
        %p155 = pneg %p56
        %p156 = pneg %p80
        %p157 = pneg %p77
        %p158 = pneg %p106
        %p159 = pneg %p103
        %s160 = sand.u32 %s93, 1
        %s161 = scalar_lea.sflag [#allocation3], %s160
        %s162 = sand.u32 %s93, 1
        %s163 = smul.addr %s162, 40
        %s164 = scalar_lea.vmem [#allocation2], %s163
        %s165 = smul.u32 5, %s17
        %p166 = scmp.lt.s32.totalorder %s165, 9
        %s167 = scalar_select %p166, %s165, 9
        %s168 = smul.addr %s167, 8
        %s169 = scalar_lea.vmem %s0, %s168
        %s170 = smul.u32 5, %s17
        %s171 = smul.u32 5, %s17
        %v173 = vld [vmem:[%s169] sm:$0xff]
        %v174 = vld [vmem:[%s169 + $0x8] sm:$0xff]
        %v175 = vld [vmem:[%s169 + $0x10] sm:$0xff]
        %v176 = vld [vmem:[%s169 + $0x18] sm:$0xff]
        %v177 = vld [vmem:[%s169 + $0x20] sm:$0xff]
        %v178 = vld [vmem:[%s1] sm:$0xff]
        %v179 = vld [vmem:[%s1 + $0x8] sm:$0xff]
        %v180 = vld [vmem:[%s1 + $0x10] sm:$0xff]
        %v181 = vld [vmem:[%s1 + $0x18] sm:$0xff]
        %v182 = vld [vmem:[%s1 + $0x20] sm:$0xff]
        %v183 = vld [vmem:[%s1 + $0x28] sm:$0xff]
        %v184 = vld [vmem:[%s1 + $0x30] sm:$0xff]
        %v185 = vld [vmem:[%s1 + $0x38] sm:$0xff]
        %v186 = vpack.c.bf16 %v174, %v173
        %v187 = vpack.c.bf16 %v176, %v175
        %v188 = vpack.c.bf16 %v177, %v177
        %v189 = vpack.c.bf16 %v179, %v178
        %v190 = vpack.c.bf16 %v181, %v180
        %v191 = vpack.c.bf16 %v183, %v182
        %v192 = vpack.c.bf16 %v185, %v184
        %v193 = vld [vmem:[%s2] sm:$0x1]
        %v194 = vperm.slane %v193, 0
        %vm195 = vcmask 523264
        %v197 = vsel %vm195, %v186, 0
        %v200 = vsel %vm195, %v187, 0
        %v203 = vsel %vm195, %v188, 0
        %205 = vmatpush.bf16.msra.mxu0 0
        %206 = vmatpush.bf16.msra.mxu0 0
        %207 = vmatpush.bf16.msra.mxu0 0
        %208 = vmatpush.bf16.msra.mxu0 0
        %209 = vmatpush.bf16.msra.mxu0 %v192
        %210 = vmatpush.bf16.msra.mxu0 %v191
        %211 = vmatpush.bf16.msra.mxu0 %v190
        %212 = vmatpush.bf16.msra.mxu0 %v189
        %213 = vmatmul.bf16.gmra.mxu0 %v197
        %v214 = vpop.f32.mrf.mxu0
        %v215 = vadd.f32 %v194, %v214
        %v216 = vpop.f32.mrf.mxu0
        %v217 = vadd.f32 %v194, %v216
        %218 = vmatmul.bf16.gmra.mxu0 %v200
        %v219 = vpop.f32.mrf.mxu0
        %v220 = vadd.f32 %v194, %v219
        %v221 = vpop.f32.mrf.mxu0
        %v222 = vadd.f32 %v194, %v221
        %223 = vmatmul.bf16.gmra.mxu0 %v203
        %v224 = vpop.f32.mrf.mxu0
        %v225 = vadd.f32 %v194, %v224
        %v226 = vpop.f32.mrf.mxu0
        %227 = vdwg.mxu0
        %228 = vadd.xlane.f32.xlu0 %v215
        %v229 = vpop.xlane.xlu0 %228
        %230 = vadd.xlane.f32.xlu0 %v217
        %v231 = vpop.xlane.xlu0 %230
        %232 = vadd.xlane.f32.xlu0 %v220
        %v233 = vpop.xlane.xlu0 %232
        %234 = vadd.xlane.f32.xlu0 %v222
        %v235 = vpop.xlane.xlu0 %234
        %236 = vadd.xlane.f32.xlu0 %v225
        %v237 = vpop.xlane.xlu0 %236
        %v238 = vrcp.pop 128.0
        %v239 = vmul.f32 128.0, %v238
        %v240 = vsub.f32 1.0, %v239
        %v241 = vmul.f32 %v238, %v240
        %v242 = vadd.f32 %v238, %v241
        %vm243 = vweird.f32 %v238
        %v244 = vsel %vm243, %v238, %v242
        %v245 = vmul.f32 %v229, %v244
        %v246 = vmul.f32 %v231, %v244
        %v247 = vmul.f32 %v233, %v244
        %v248 = vmul.f32 %v235, %v244
        %v249 = vmul.f32 %v237, %v244
        %v250 = vsub.f32 %v215, %v245
        %v251 = vsub.f32 %v217, %v246
        %v252 = vsub.f32 %v220, %v247
        %v253 = vsub.f32 %v222, %v248
        %v254 = vsub.f32 %v225, %v249
        %v255 = vmul.f32 %v250, %v250
        %v256 = vmul.f32 %v251, %v251
        %v257 = vmul.f32 %v252, %v252
        %v258 = vmul.f32 %v253, %v253
        %v259 = vmul.f32 %v254, %v254
        %260 = vadd.xlane.f32.xlu0 %v255
        %v261 = vpop.xlane.xlu0 %260
        %262 = vadd.xlane.f32.xlu0 %v256
        %v263 = vpop.xlane.xlu0 %262
        %264 = vadd.xlane.f32.xlu0 %v257
        %v265 = vpop.xlane.xlu0 %264
        %266 = vadd.xlane.f32.xlu0 %v258
        %v267 = vpop.xlane.xlu0 %266
        %268 = vadd.xlane.f32.xlu0 %v259
        %v269 = vpop.xlane.xlu0 %268
        %v270 = vmul.f32 %v261, %v244
        %v271 = vmul.f32 %v263, %v244
        %v272 = vmul.f32 %v265, %v244
        %v273 = vmul.f32 %v267, %v244
        %v274 = vmul.f32 %v269, %v244
        %v275 = vadd.f32 %v270, 1e-05
        %v276 = vadd.f32 %v271, 1e-05
        %v277 = vadd.f32 %v272, 1e-05
        %v278 = vadd.f32 %v273, 1e-05
        %v279 = vadd.f32 %v274, 1e-05
        %v280 = vrsqrt.pop %v275
        %v281 = vmul.f32 %v280, %v275
        %v282 = vmul.f32 %v281, %v280
        %v283 = vmul.f32 0.5, %v282
        %v284 = vsub.f32 1.5, %v283
        %v285 = vmul.f32 %v280, %v284
        %vm286 = vweird.f32 %v275
        %vm287 = vweird.f32 %v280
        %vm288 = vmor %vm286, %vm287
        %v289 = vsel %vm288, %v280, %v285
        %v290 = vrsqrt.pop %v276
        %v291 = vmul.f32 %v290, %v276
        %v292 = vmul.f32 %v291, %v290
        %v293 = vmul.f32 0.5, %v292
        %v294 = vsub.f32 1.5, %v293
        %v295 = vmul.f32 %v290, %v294
        %vm296 = vweird.f32 %v276
        %vm297 = vweird.f32 %v290
        %vm298 = vmor %vm296, %vm297
        %v299 = vsel %vm298, %v290, %v295
        %v300 = vrsqrt.pop %v277
        %v301 = vmul.f32 %v300, %v277
        %v302 = vmul.f32 %v301, %v300
        %v303 = vmul.f32 0.5, %v302
        %v304 = vsub.f32 1.5, %v303
        %v305 = vmul.f32 %v300, %v304
        %vm306 = vweird.f32 %v277
        %vm307 = vweird.f32 %v300
        %vm308 = vmor %vm306, %vm307
        %v309 = vsel %vm308, %v300, %v305
        %v310 = vrsqrt.pop %v278
        %v311 = vmul.f32 %v310, %v278
        %v312 = vmul.f32 %v311, %v310
        %v313 = vmul.f32 0.5, %v312
        %v314 = vsub.f32 1.5, %v313
        %v315 = vmul.f32 %v310, %v314
        %vm316 = vweird.f32 %v278
        %vm317 = vweird.f32 %v310
        %vm318 = vmor %vm316, %vm317
        %v319 = vsel %vm318, %v310, %v315
        %v320 = vrsqrt.pop %v279
        %v321 = vmul.f32 %v320, %v279
        %v322 = vmul.f32 %v321, %v320
        %v323 = vmul.f32 0.5, %v322
        %v324 = vsub.f32 1.5, %v323
        %v325 = vmul.f32 %v320, %v324
        %vm326 = vweird.f32 %v279
        %vm327 = vweird.f32 %v320
        %vm328 = vmor %vm326, %vm327
        %v329 = vsel %vm328, %v320, %v325
        %v330 = vmul.f32 %v250, %v289
        %v331 = vmul.f32 %v251, %v299
        %v332 = vmul.f32 %v252, %v309
        %v333 = vmul.f32 %v253, %v319
        %v334 = vmul.f32 %v254, %v329
        %v335 = vld [vmem:[%s2 + $0x1] sm:$0x1]
        %v336 = vperm.slane %v335, 0
        %v337 = vmul.f32 %v330, %v336
        %v338 = vmul.f32 %v331, %v336
        %v339 = vmul.f32 %v332, %v336
        %v340 = vmul.f32 %v333, %v336
        %v341 = vmul.f32 %v334, %v336
        %v342 = vld [vmem:[%s2 + $0x2] sm:$0x1]
        %v343 = vperm.slane %v342, 0
        %v344 = vadd.f32 %v337, %v343
        %v345 = vadd.f32 %v338, %v343
        %v346 = vadd.f32 %v339, %v343
        %v347 = vadd.f32 %v340, %v343
        %v348 = vadd.f32 %v341, %v343
        %v349 = vand.u32 2147483647, %v344
        %v350 = vand.u32 2147483647, %v345
        %v351 = vand.u32 2147483647, %v346
        %v352 = vand.u32 2147483647, %v347
        %v353 = vand.u32 2147483647, %v348
        %v354 = vadd.f32 %v349, 1.0
        %v355 = vadd.f32 %v350, 1.0
        %v356 = vadd.f32 %v351, 1.0
        %v357 = vadd.f32 %v352, 1.0
        %v358 = vadd.f32 %v353, 1.0
        %v359 = vrcp.pop %v354
        %v360 = vmul.f32 %v354, %v359
        %v361 = vsub.f32 1.0, %v360
        %v362 = vmul.f32 %v359, %v361
        %v363 = vadd.f32 %v359, %v362
        %vm364 = vweird.f32 %v354
        %vm365 = vweird.f32 %v359
        %vm366 = vmor %vm364, %vm365
        %v367 = vsel %vm366, %v359, %v363
        %v368 = vand.u32 2147483647, %v354
        %vm369 = vcmp.eq.f32.partialorder %v368, 8.507059e+37
        %v370 = vand.u32 %v354, 2147483648
        %v371 = vor.u32 1.1754944e-38, %v370
        %v372 = vsel %vm369, %v371, %v367
        %v373 = vmul.f32 %v344, %v372
        %v374 = vrcp.pop %v355
        %v375 = vmul.f32 %v355, %v374
        %v376 = vsub.f32 1.0, %v375
        %v377 = vmul.f32 %v374, %v376
        %v378 = vadd.f32 %v374, %v377
        %vm379 = vweird.f32 %v355
        %vm380 = vweird.f32 %v374
        %vm381 = vmor %vm379, %vm380
        %v382 = vsel %vm381, %v374, %v378
        %v383 = vand.u32 2147483647, %v355
        %vm384 = vcmp.eq.f32.partialorder %v383, 8.507059e+37
        %v385 = vand.u32 %v355, 2147483648
        %v386 = vor.u32 1.1754944e-38, %v385
        %v387 = vsel %vm384, %v386, %v382
        %v388 = vmul.f32 %v345, %v387
        %v389 = vrcp.pop %v356
        %v390 = vmul.f32 %v356, %v389
        %v391 = vsub.f32 1.0, %v390
        %v392 = vmul.f32 %v389, %v391
        %v393 = vadd.f32 %v389, %v392
        %vm394 = vweird.f32 %v356
        %vm395 = vweird.f32 %v389
        %vm396 = vmor %vm394, %vm395
        %v397 = vsel %vm396, %v389, %v393
        %v398 = vand.u32 2147483647, %v356
        %vm399 = vcmp.eq.f32.partialorder %v398, 8.507059e+37
        %v400 = vand.u32 %v356, 2147483648
        %v401 = vor.u32 1.1754944e-38, %v400
        %v402 = vsel %vm399, %v401, %v397
        %v403 = vmul.f32 %v346, %v402
        %v404 = vrcp.pop %v357
        %v405 = vmul.f32 %v357, %v404
        %v406 = vsub.f32 1.0, %v405
        %v407 = vmul.f32 %v404, %v406
        %v408 = vadd.f32 %v404, %v407
        %vm409 = vweird.f32 %v357
        %vm410 = vweird.f32 %v404
        %vm411 = vmor %vm409, %vm410
        %v412 = vsel %vm411, %v404, %v408
        %v413 = vand.u32 2147483647, %v357
        %vm414 = vcmp.eq.f32.partialorder %v413, 8.507059e+37
        %v415 = vand.u32 %v357, 2147483648
        %v416 = vor.u32 1.1754944e-38, %v415
        %v417 = vsel %vm414, %v416, %v412
        %v418 = vmul.f32 %v347, %v417
        %v419 = vrcp.pop %v358
        %v420 = vmul.f32 %v358, %v419
        %v421 = vsub.f32 1.0, %v420
        %v422 = vmul.f32 %v419, %v421
        %v423 = vadd.f32 %v419, %v422
        %vm424 = vweird.f32 %v358
        %vm425 = vweird.f32 %v419
        %vm426 = vmor %vm424, %vm425
        %v427 = vsel %vm426, %v419, %v423
        %v428 = vand.u32 2147483647, %v358
        %vm429 = vcmp.eq.f32.partialorder %v428, 8.507059e+37
        %v430 = vand.u32 %v358, 2147483648
        %v431 = vor.u32 1.1754944e-38, %v430
        %v432 = vsel %vm429, %v431, %v427
        %v433 = vmul.f32 %v348, %v432
        %v434 = vmul.f32 %v373, 11.313708
        %v435 = vmul.f32 %v388, 11.313708
        %v436 = vmul.f32 %v403, 11.313708
        %v437 = vmul.f32 %v418, 11.313708
        %v438 = vmul.f32 %v433, 11.313708
        %439 = vst [vmem:[%s164] sm:$0xff] %v434
        %440 = vst [vmem:[%s164 + $0x8] sm:$0xff] %v435
        %441 = vst [vmem:[%s164 + $0x10] sm:$0xff] %v436
        %442 = vst [vmem:[%s164 + $0x18] sm:$0xff] %v437
        %443 = vst [vmem:[%s164 + $0x20] sm:$0xff] %v438
        %s444 = sand.u32 %s93, 1
        %s445 = scalar_lea.sflag [#allocation3], %s444
        %s446 = sand.u32 %s93, 1
        %s447 = smul.addr %s446, 40
        %s448 = scalar_lea.vmem [#allocation2], %s447
        // Predicated region
        $region33: #{tpu_custom_call.1} parent=31 // pred_check
          %p449 = pneg %p103
        $region34: #{tpu_custom_call.1} parent=31 // pred_check_branch
          %451 = sbr.rel (%p449) target = $region36
        $region35: #{tpu_custom_call.1} parent=31 // pred_region
          %s452 = smul.u32 5, %s17
          %454 = vsyncadd %s445, 0
          %s455 = smul.addr %s452, 8
          %s456 = scalar_lea.hbm %s3, %s455
          %s457 = sshll.u32 %s448, 4
          %s458 = int_to_ptr.vmem [resolvable:$true] %s457
          %s459 = sshll.u32 %s456, 4
          %s460 = int_to_ptr.hbm [resolvable:$true] %s459
          %465 = dma.vmem_to_hbm [thread:$0]  %s458, 640, %s460, %s445, 128, 128, 8
        $region36: #{tpu_custom_call.1} parent=31 // pred_fallthru
          _
      $region32: #{tpu_custom_call.1} parent=5 // pred_fallthru
        _
      %p466 = scmp.le.s32.totalorder 2, %s12
      // Predicated region
      $region37: #{tpu_custom_call.1} parent=5 // pred_check
        %p467 = pneg %p466
      $region38: #{tpu_custom_call.1} parent=5 // pred_check_branch
        %469 = sbr.rel (%p467) target = $region40
      $region39: #{tpu_custom_call.1} parent=5 // pred_region
        %s470 = ssub.s32 %s12, 2
        // Predicated region
        $region41: #{tpu_custom_call.1} parent=39 // pred_check
          %p471 = pneg %p109
        $region42: #{tpu_custom_call.1} parent=39 // pred_check_branch
          %473 = sbr.rel (%p471) target = $region44
        $region43: #{tpu_custom_call.1} parent=39 // pred_region
          %s474 = sand.u32 %s94, 1
          %s475 = scalar_lea.sflag [#allocation3], %s474
          %s476 = sand.u32 %s94, 1
          %s477 = smul.addr %s476, 40
          %s478 = scalar_lea.vmem [#allocation2], %s477
          %480 = dma.done %s475, 640
        $region44: #{tpu_custom_call.1} parent=39 // pred_fallthru
          _
      $region40: #{tpu_custom_call.1} parent=5 // pred_fallthru
        _
    $region6: #{tpu_custom_call.1} parent=1 // loop_footer
      %s16 = sadd.s32 1, %s12
    $region7: #{tpu_custom_call.1} parent=1 // loop_footer_branch
      %11 = sbr.rel target = $region3
    $region8: #{tpu_custom_call.1} parent=1 // loop_exit
      _
    %481 = vsyncpa [#allocation3], 1
    %s482 = scalar_lea.sflag [#allocation3], 1
    %483 = vsyncpa %s482, 1

// kernel: tpu_custom_call.1
$region0: #{tpu_custom_call.1}
  #allocation0 [shape = 'u32[]', space=smem, size = 0x4, offset = 0x4, fixed_abs, tag = 'smem constant byte address 0x4 - core index']
  #allocation1 [shape = 'u32[72,128]{1,0:T(1,128)}', space=vmem, size = 0x9000, scoped, tag = 'internal scratch']
  %s0 = inlined_call_operand.vmem [shape: f32[74,64], index: 0, kind: input, shape index: {}]
  %s1 = inlined_call_operand.vmem [shape: f32[64,128], index: 1, kind: input, shape index: {}]
  %s2 = inlined_call_operand.vmem [shape: f32[8,128], index: 2, kind: input, shape index: {}]
  %s3 = inlined_call_operand.hbm [shape: f32[74,128], index: 3, kind: output, shape index: {}]
  %s4 = sld [smem:[#allocation0]]
  $region45: #{tpu_custom_call.1} parent=0
    _
  %s6 = ssub.s32 1, %s4
  %s7 = scalar_select 0, %s6, %s4
  $region1: #{tpu_custom_call.1} parent=0
    #allocation2 [shape = 'u8[40960]{0}', space=vmem, size = 0xa000, scoped, tag = 'output window, operand 0']
    #allocation3 [shape = 's32[2]{0}', space=sflag, size = 0x8, scoped, tag = 'scoped memory for tpu_custom_call.1']
    %8 = vsyncpa [#allocation3], 0
    %s9 = scalar_lea.sflag [#allocation3], 1
    %10 = vsyncpa %s9, 0
    loop: start=0, step=1, limit=4
    $region2: #{tpu_custom_call.1} parent=1 // loop_pre_header
      _
    $region3: #{tpu_custom_call.1} parent=1 // loop_header
      %s12 = sphi 0, %s16
      %p13 = scmp.ge.s32.totalorder %s12, 4
      %s22 = sphi 0, %s24
      %s25 = sphi 0, %s22
      %s26 = sphi 0, %s25
      %s42 = sphi 0, %s26
      %s46 = sphi 0, %s46
      %s48 = sphi 0, %s46
      %s49 = sphi 0, %s48
      %s63 = sphi 0, %s49
      %s67 = sphi 0, %s67
      %s69 = sphi 0, %s67
      %s70 = sphi 0, %s69
      %s84 = sphi 0, %s70
      %s90 = sphi 0, %s92
      %s93 = sphi 0, %s90
      %s94 = sphi 0, %s93
      %s110 = sphi 0, %s94
    $region4: #{tpu_custom_call.1} parent=1 // loop_header_branch
      %15 = sbr.rel (%p13) target = $region8
    $region5: #{tpu_custom_call.1} parent=1 // loop_body
      %s17 = ssub.s32 %s12, 1
      %s18 = ssub.s32 %s12, 2
      %s19 = sadd.s32 %s12, 1
      %s20 = ssub.s32 %s12, %s19
      %p21 = scmp.eq.s32.totalorder %s20, 0
      %s23 = sadd.s32 %s22, 1
      %s24 = scalar_select %p21, %s22, %s23
      %p27 = pneg %p21
      %p28 = scmp.eq.s32.totalorder %s12, 1
      %p29 = por %p27, %p28
      %p30 = scmp.ne.s32.totalorder %s22, %s25
      %p31 = scmp.eq.s32.totalorder %s12, 0
      %p32 = por %p30, %p31
      %p33 = scmp.ne.s32.totalorder %s22, %s25
      %p34 = scmp.eq.s32.totalorder %s17, 1
      %p35 = por %p33, %p34
      %p36 = scmp.ne.s32.totalorder %s25, %s26
      %p37 = scmp.eq.s32.totalorder %s17, 0
      %p38 = por %p36, %p37
      %p39 = scmp.ne.s32.totalorder %s25, %s26
      %p40 = scmp.eq.s32.totalorder %s18, 1
      %p41 = por %p39, %p40
      %p43 = scmp.ne.s32.totalorder %s26, %s42
      %p44 = scmp.eq.s32.totalorder %s18, 0
      %p45 = por %p43, %p44
      %s47 = sadd.s32 %s46, 1
      %p50 = scmp.eq.s32.totalorder %s12, 1
      %p51 = scmp.ne.s32.totalorder %s46, %s48
      %p52 = scmp.eq.s32.totalorder %s12, 0
      %p53 = por %p51, %p52
      %p54 = scmp.ne.s32.totalorder %s46, %s48
      %p55 = scmp.eq.s32.totalorder %s17, 1
      %p56 = por %p54, %p55
      %p57 = scmp.ne.s32.totalorder %s48, %s49
      %p58 = scmp.eq.s32.totalorder %s17, 0
      %p59 = por %p57, %p58
      %p60 = scmp.ne.s32.totalorder %s48, %s49
      %p61 = scmp.eq.s32.totalorder %s18, 1
      %p62 = por %p60, %p61
      %p64 = scmp.ne.s32.totalorder %s49, %s63
      %p65 = scmp.eq.s32.totalorder %s18, 0
      %p66 = por %p64, %p65
      %s68 = sadd.s32 %s67, 1
      %p71 = scmp.eq.s32.totalorder %s12, 1
      %p72 = scmp.ne.s32.totalorder %s67, %s69
      %p73 = scmp.eq.s32.totalorder %s12, 0
      %p74 = por %p72, %p73
      %p75 = scmp.ne.s32.totalorder %s67, %s69
      %p76 = scmp.eq.s32.totalorder %s17, 1
      %p77 = por %p75, %p76
      %p78 = scmp.ne.s32.totalorder %s69, %s70
      %p79 = scmp.eq.s32.totalorder %s17, 0
      %p80 = por %p78, %p79
      %p81 = scmp.ne.s32.totalorder %s69, %s70
      %p82 = scmp.eq.s32.totalorder %s18, 1
      %p83 = por %p81, %p82
      %p85 = scmp.ne.s32.totalorder %s70, %s84
      %p86 = scmp.eq.s32.totalorder %s18, 0
      %p87 = por %p85, %p86
      %s88 = ssub.s32 %s12, %s19
      %p89 = scmp.eq.s32.totalorder %s88, 0
      %s91 = sadd.s32 %s90, 1
      %s92 = scalar_select %p89, %s90, %s91
      %p95 = pneg %p89
      %p96 = scmp.eq.s32.totalorder %s12, 1
      %p97 = por %p95, %p96
      %p98 = scmp.ne.s32.totalorder %s90, %s93
      %p99 = scmp.eq.s32.totalorder %s12, 0
      %p100 = por %p98, %p99
      %p101 = scmp.ne.s32.totalorder %s90, %s93
      %p102 = scmp.eq.s32.totalorder %s17, 1
      %p103 = por %p101, %p102
      %p104 = scmp.ne.s32.totalorder %s93, %s94
      %p105 = scmp.eq.s32.totalorder %s17, 0
      %p106 = por %p104, %p105
      %p107 = scmp.ne.s32.totalorder %s93, %s94
      %p108 = scmp.eq.s32.totalorder %s18, 1
      %p109 = por %p107, %p108
      %p111 = scmp.ne.s32.totalorder %s94, %s110
      %p112 = scmp.eq.s32.totalorder %s18, 0
      %p113 = por %p111, %p112
      %p114 = scmp.le.s32.totalorder 1, %s12
      %p115 = scmp.lt.s32.totalorder %s12, 3
      %p116 = pnand %p114, %p115
      %p117 = pneg %p116
      // Predicated region
      $region9: #{tpu_custom_call.1} parent=5 // pred_check
        _
      $region10: #{tpu_custom_call.1} parent=5 // pred_check_branch
        %119 = sbr.rel (%p116) target = $region12
      $region11: #{tpu_custom_call.1} parent=5 // pred_region
        %s120 = ssub.s32 %s12, 1
        // Predicated region
        $region13: #{tpu_custom_call.1} parent=11 // pred_check
          %p121 = pneg %p59
        $region14: #{tpu_custom_call.1} parent=11 // pred_check_branch
          %123 = sbr.rel (%p121) target = $region16
        $region15: #{tpu_custom_call.1} parent=11 // pred_region
          _
        $region16: #{tpu_custom_call.1} parent=11 // pred_fallthru
          _
        // Predicated region
        $region17: #{tpu_custom_call.1} parent=11 // pred_check
          %p124 = pneg %p80
        $region18: #{tpu_custom_call.1} parent=11 // pred_check_branch
          %126 = sbr.rel (%p124) target = $region20
        $region19: #{tpu_custom_call.1} parent=11 // pred_region
          _
        $region20: #{tpu_custom_call.1} parent=11 // pred_fallthru
          _
      $region12: #{tpu_custom_call.1} parent=5 // pred_fallthru
        _
      %p127 = scmp.lt.s32.totalorder %s12, 2
      // Predicated region
      $region21: #{tpu_custom_call.1} parent=5 // pred_check
        %p128 = pneg %p127
      $region22: #{tpu_custom_call.1} parent=5 // pred_check_branch
        %130 = sbr.rel (%p128) target = $region24
      $region23: #{tpu_custom_call.1} parent=5 // pred_region
        // Predicated region
        $region25: #{tpu_custom_call.1} parent=23 // pred_check
          %p131 = pneg %p32
        $region26: #{tpu_custom_call.1} parent=23 // pred_check_branch
          %133 = sbr.rel (%p131) target = $region28
        $region27: #{tpu_custom_call.1} parent=23 // pred_region
          %s134 = smul.u32 5, %s12
          %p135 = scmp.lt.s32.totalorder %s134, 9
          %s136 = scalar_select %p135, %s134, 9
          %s137 = smul.addr %s136, 8
          %s138 = scalar_lea.vmem %s0, %s137
          %s139 = smul.u32 5, %s12
        $region28: #{tpu_custom_call.1} parent=23 // pred_fallthru
          _
      $region24: #{tpu_custom_call.1} parent=5 // pred_fallthru
        _
      %p140 = scmp.le.s32.totalorder 1, %s12
      %p141 = scmp.lt.s32.totalorder %s12, 3
      %p142 = pnand %p140, %p141
      %p143 = pneg %p142
      // Predicated region
      $region29: #{tpu_custom_call.1} parent=5 // pred_check
        _
      $region30: #{tpu_custom_call.1} parent=5 // pred_check_branch
        %145 = sbr.rel (%p142) target = $region32
      $region31: #{tpu_custom_call.1} parent=5 // pred_region
        %s146 = ssub.s32 %s12, 1
        %s147 = smul.u32 5, %s17
        %p148 = scmp.lt.s32.totalorder %s147, 9
        %s149 = scalar_select %p148, %s147, 9
        %s150 = smul.addr %s149, 8
        %s151 = scalar_lea.vmem %s0, %s150
        %p152 = pneg %p38
        %p153 = pneg %p35
        %p154 = pneg %p59
        %p155 = pneg %p56
        %p156 = pneg %p80
        %p157 = pneg %p77
        %p158 = pneg %p106
        %p159 = pneg %p103
        %s160 = sand.u32 %s93, 1
        %s161 = scalar_lea.sflag [#allocation3], %s160
        %s162 = sand.u32 %s93, 1
        %s163 = smul.addr %s162, 40
        %s164 = scalar_lea.vmem [#allocation2], %s163
        %s165 = smul.u32 5, %s17
        %p166 = scmp.lt.s32.totalorder %s165, 9
        %s167 = scalar_select %p166, %s165, 9
        %s168 = smul.addr %s167, 8
        %s169 = scalar_lea.vmem %s0, %s168
        %s170 = smul.u32 5, %s17
        %s171 = smul.u32 5, %s17
        %v173 = vld [vmem:[%s169] sm:$0xff]
        %v174 = vld [vmem:[%s169 + $0x8] sm:$0xff]
        %v175 = vld [vmem:[%s169 + $0x10] sm:$0xff]
        %v176 = vld [vmem:[%s169 + $0x18] sm:$0xff]
        %v177 = vld [vmem:[%s169 + $0x20] sm:$0xff]
        %v178 = vld [vmem:[%s1] sm:$0xff]
        %v179 = vld [vmem:[%s1 + $0x8] sm:$0xff]
        %v180 = vld [vmem:[%s1 + $0x10] sm:$0xff]
        %v181 = vld [vmem:[%s1 + $0x18] sm:$0xff]
        %v182 = vld [vmem:[%s1 + $0x20] sm:$0xff]
        %v183 = vld [vmem:[%s1 + $0x28] sm:$0xff]
        %v184 = vld [vmem:[%s1 + $0x30] sm:$0xff]
        %v185 = vld [vmem:[%s1 + $0x38] sm:$0xff]
        %v186 = vpack.c.bf16 %v174, %v173
        %v187 = vpack.c.bf16 %v176, %v175
        %v188 = vpack.c.bf16 %v177, %v177
        %v189 = vpack.c.bf16 %v179, %v178
        %v190 = vpack.c.bf16 %v181, %v180
        %v191 = vpack.c.bf16 %v183, %v182
        %v192 = vpack.c.bf16 %v185, %v184
        %v193 = vld [vmem:[%s2] sm:$0x1]
        %v194 = vperm.slane %v193, 0
        %vm195 = vcmask 523264
        %v197 = vsel %vm195, %v186, 0
        %v200 = vsel %vm195, %v187, 0
        %v203 = vsel %vm195, %v188, 0
        %205 = vmatpush.bf16.msra.mxu0 0
        %206 = vmatpush.bf16.msra.mxu0 0
        %207 = vmatpush.bf16.msra.mxu0 0
        %208 = vmatpush.bf16.msra.mxu0 0
        %209 = vmatpush.bf16.msra.mxu0 %v192
        %210 = vmatpush.bf16.msra.mxu0 %v191
        %211 = vmatpush.bf16.msra.mxu0 %v190
        %212 = vmatpush.bf16.msra.mxu0 %v189
        %213 = vmatmul.bf16.gmra.mxu0 %v197
        %v214 = vpop.f32.mrf.mxu0
        %v215 = vadd.f32 %v194, %v214
        %v216 = vpop.f32.mrf.mxu0
        %v217 = vadd.f32 %v194, %v216
        %218 = vmatmul.bf16.gmra.mxu0 %v200
        %v219 = vpop.f32.mrf.mxu0
        %v220 = vadd.f32 %v194, %v219
        %v221 = vpop.f32.mrf.mxu0
        %v222 = vadd.f32 %v194, %v221
        %223 = vmatmul.bf16.gmra.mxu0 %v203
        %v224 = vpop.f32.mrf.mxu0
        %v225 = vadd.f32 %v194, %v224
        %v226 = vpop.f32.mrf.mxu0
        %227 = vdwg.mxu0
        %228 = vadd.xlane.f32.xlu0 %v215
        %v229 = vpop.xlane.xlu0 %228
        %230 = vadd.xlane.f32.xlu0 %v217
        %v231 = vpop.xlane.xlu0 %230
        %232 = vadd.xlane.f32.xlu0 %v220
        %v233 = vpop.xlane.xlu0 %232
        %234 = vadd.xlane.f32.xlu0 %v222
        %v235 = vpop.xlane.xlu0 %234
        %236 = vadd.xlane.f32.xlu0 %v225
        %v237 = vpop.xlane.xlu0 %236
        %v238 = vrcp.pop 128.0
        %v239 = vmul.f32 128.0, %v238
        %v240 = vsub.f32 1.0, %v239
        %v241 = vmul.f32 %v238, %v240
        %v242 = vadd.f32 %v238, %v241
        %vm243 = vweird.f32 %v238
        %v244 = vsel %vm243, %v238, %v242
        %v245 = vmul.f32 %v229, %v244
        %v246 = vmul.f32 %v231, %v244
        %v247 = vmul.f32 %v233, %v244
        %v248 = vmul.f32 %v235, %v244
        %v249 = vmul.f32 %v237, %v244
        %v250 = vsub.f32 %v215, %v245
        %v251 = vsub.f32 %v217, %v246
        %v252 = vsub.f32 %v220, %v247
        %v253 = vsub.f32 %v222, %v248
        %v254 = vsub.f32 %v225, %v249
        %v255 = vmul.f32 %v250, %v250
        %v256 = vmul.f32 %v251, %v251
        %v257 = vmul.f32 %v252, %v252
        %v258 = vmul.f32 %v253, %v253
        %v259 = vmul.f32 %v254, %v254
        %260 = vadd.xlane.f32.xlu0 %v255
        %v261 = vpop.xlane.xlu0 %260
        %262 = vadd.xlane.f32.xlu0 %v256
        %v263 = vpop.xlane.xlu0 %262
        %264 = vadd.xlane.f32.xlu0 %v257
        %v265 = vpop.xlane.xlu0 %264
        %266 = vadd.xlane.f32.xlu0 %v258
        %v267 = vpop.xlane.xlu0 %266
        %268 = vadd.xlane.f32.xlu0 %v259
        %v269 = vpop.xlane.xlu0 %268
        %v270 = vmul.f32 %v261, %v244
        %v271 = vmul.f32 %v263, %v244
        %v272 = vmul.f32 %v265, %v244
        %v273 = vmul.f32 %v267, %v244
        %v274 = vmul.f32 %v269, %v244
        %v275 = vadd.f32 %v270, 1e-05
        %v276 = vadd.f32 %v271, 1e-05
        %v277 = vadd.f32 %v272, 1e-05
        %v278 = vadd.f32 %v273, 1e-05
        %v279 = vadd.f32 %v274, 1e-05
        %v280 = vrsqrt.pop %v275
        %v281 = vmul.f32 %v280, %v275
        %v282 = vmul.f32 %v281, %v280
        %v283 = vmul.f32 0.5, %v282
        %v284 = vsub.f32 1.5, %v283
        %v285 = vmul.f32 %v280, %v284
        %vm286 = vweird.f32 %v275
        %vm287 = vweird.f32 %v280
        %vm288 = vmor %vm286, %vm287
        %v289 = vsel %vm288, %v280, %v285
        %v290 = vrsqrt.pop %v276
        %v291 = vmul.f32 %v290, %v276
        %v292 = vmul.f32 %v291, %v290
        %v293 = vmul.f32 0.5, %v292
        %v294 = vsub.f32 1.5, %v293
        %v295 = vmul.f32 %v290, %v294
        %vm296 = vweird.f32 %v276
        %vm297 = vweird.f32 %v290
        %vm298 = vmor %vm296, %vm297
        %v299 = vsel %vm298, %v290, %v295
        %v300 = vrsqrt.pop %v277
        %v301 = vmul.f32 %v300, %v277
        %v302 = vmul.f32 %v301, %v300
        %v303 = vmul.f32 0.5, %v302
        %v304 = vsub.f32 1.5, %v303
        %v305 = vmul.f32 %v300, %v304
        %vm306 = vweird.f32 %v277
        %vm307 = vweird.f32 %v300
        %vm308 = vmor %vm306, %vm307
        %v309 = vsel %vm308, %v300, %v305
        %v310 = vrsqrt.pop %v278
        %v311 = vmul.f32 %v310, %v278
        %v312 = vmul.f32 %v311, %v310
        %v313 = vmul.f32 0.5, %v312
        %v314 = vsub.f32 1.5, %v313
        %v315 = vmul.f32 %v310, %v314
        %vm316 = vweird.f32 %v278
        %vm317 = vweird.f32 %v310
        %vm318 = vmor %vm316, %vm317
        %v319 = vsel %vm318, %v310, %v315
        %v320 = vrsqrt.pop %v279
        %v321 = vmul.f32 %v320, %v279
        %v322 = vmul.f32 %v321, %v320
        %v323 = vmul.f32 0.5, %v322
        %v324 = vsub.f32 1.5, %v323
        %v325 = vmul.f32 %v320, %v324
        %vm326 = vweird.f32 %v279
        %vm327 = vweird.f32 %v320
        %vm328 = vmor %vm326, %vm327
        %v329 = vsel %vm328, %v320, %v325
        %v330 = vmul.f32 %v250, %v289
        %v331 = vmul.f32 %v251, %v299
        %v332 = vmul.f32 %v252, %v309
        %v333 = vmul.f32 %v253, %v319
        %v334 = vmul.f32 %v254, %v329
        %v335 = vld [vmem:[%s2 + $0x1] sm:$0x1]
        %v336 = vperm.slane %v335, 0
        %v337 = vmul.f32 %v330, %v336
        %v338 = vmul.f32 %v331, %v336
        %v339 = vmul.f32 %v332, %v336
        %v340 = vmul.f32 %v333, %v336
        %v341 = vmul.f32 %v334, %v336
        %v342 = vld [vmem:[%s2 + $0x2] sm:$0x1]
        %v343 = vperm.slane %v342, 0
        %v344 = vadd.f32 %v337, %v343
        %v345 = vadd.f32 %v338, %v343
        %v346 = vadd.f32 %v339, %v343
        %v347 = vadd.f32 %v340, %v343
        %v348 = vadd.f32 %v341, %v343
        %v349 = vand.u32 2147483647, %v344
        %v350 = vand.u32 2147483647, %v345
        %v351 = vand.u32 2147483647, %v346
        %v352 = vand.u32 2147483647, %v347
        %v353 = vand.u32 2147483647, %v348
        %v354 = vadd.f32 %v349, 1.0
        %v355 = vadd.f32 %v350, 1.0
        %v356 = vadd.f32 %v351, 1.0
        %v357 = vadd.f32 %v352, 1.0
        %v358 = vadd.f32 %v353, 1.0
        %v359 = vrcp.pop %v354
        %v360 = vmul.f32 %v354, %v359
        %v361 = vsub.f32 1.0, %v360
        %v362 = vmul.f32 %v359, %v361
        %v363 = vadd.f32 %v359, %v362
        %vm364 = vweird.f32 %v354
        %vm365 = vweird.f32 %v359
        %vm366 = vmor %vm364, %vm365
        %v367 = vsel %vm366, %v359, %v363
        %v368 = vand.u32 2147483647, %v354
        %vm369 = vcmp.eq.f32.partialorder %v368, 8.507059e+37
        %v370 = vand.u32 %v354, 2147483648
        %v371 = vor.u32 1.1754944e-38, %v370
        %v372 = vsel %vm369, %v371, %v367
        %v373 = vmul.f32 %v344, %v372
        %v374 = vrcp.pop %v355
        %v375 = vmul.f32 %v355, %v374
        %v376 = vsub.f32 1.0, %v375
        %v377 = vmul.f32 %v374, %v376
        %v378 = vadd.f32 %v374, %v377
        %vm379 = vweird.f32 %v355
        %vm380 = vweird.f32 %v374
        %vm381 = vmor %vm379, %vm380
        %v382 = vsel %vm381, %v374, %v378
        %v383 = vand.u32 2147483647, %v355
        %vm384 = vcmp.eq.f32.partialorder %v383, 8.507059e+37
        %v385 = vand.u32 %v355, 2147483648
        %v386 = vor.u32 1.1754944e-38, %v385
        %v387 = vsel %vm384, %v386, %v382
        %v388 = vmul.f32 %v345, %v387
        %v389 = vrcp.pop %v356
        %v390 = vmul.f32 %v356, %v389
        %v391 = vsub.f32 1.0, %v390
        %v392 = vmul.f32 %v389, %v391
        %v393 = vadd.f32 %v389, %v392
        %vm394 = vweird.f32 %v356
        %vm395 = vweird.f32 %v389
        %vm396 = vmor %vm394, %vm395
        %v397 = vsel %vm396, %v389, %v393
        %v398 = vand.u32 2147483647, %v356
        %vm399 = vcmp.eq.f32.partialorder %v398, 8.507059e+37
        %v400 = vand.u32 %v356, 2147483648
        %v401 = vor.u32 1.1754944e-38, %v400
        %v402 = vsel %vm399, %v401, %v397
        %v403 = vmul.f32 %v346, %v402
        %v404 = vrcp.pop %v357
        %v405 = vmul.f32 %v357, %v404
        %v406 = vsub.f32 1.0, %v405
        %v407 = vmul.f32 %v404, %v406
        %v408 = vadd.f32 %v404, %v407
        %vm409 = vweird.f32 %v357
        %vm410 = vweird.f32 %v404
        %vm411 = vmor %vm409, %vm410
        %v412 = vsel %vm411, %v404, %v408
        %v413 = vand.u32 2147483647, %v357
        %vm414 = vcmp.eq.f32.partialorder %v413, 8.507059e+37
        %v415 = vand.u32 %v357, 2147483648
        %v416 = vor.u32 1.1754944e-38, %v415
        %v417 = vsel %vm414, %v416, %v412
        %v418 = vmul.f32 %v347, %v417
        %v419 = vrcp.pop %v358
        %v420 = vmul.f32 %v358, %v419
        %v421 = vsub.f32 1.0, %v420
        %v422 = vmul.f32 %v419, %v421
        %v423 = vadd.f32 %v419, %v422
        %vm424 = vweird.f32 %v358
        %vm425 = vweird.f32 %v419
        %vm426 = vmor %vm424, %vm425
        %v427 = vsel %vm426, %v419, %v423
        %v428 = vand.u32 2147483647, %v358
        %vm429 = vcmp.eq.f32.partialorder %v428, 8.507059e+37
        %v430 = vand.u32 %v358, 2147483648
        %v431 = vor.u32 1.1754944e-38, %v430
        %v432 = vsel %vm429, %v431, %v427
        %v433 = vmul.f32 %v348, %v432
        %v434 = vmul.f32 %v373, 11.313708
        %v435 = vmul.f32 %v388, 11.313708
        %v436 = vmul.f32 %v403, 11.313708
        %v437 = vmul.f32 %v418, 11.313708
        %v438 = vmul.f32 %v433, 11.313708
        %439 = vst [vmem:[%s164] sm:$0xff] %v434
        %440 = vst [vmem:[%s164 + $0x8] sm:$0xff] %v435
        %441 = vst [vmem:[%s164 + $0x10] sm:$0xff] %v436
        %442 = vst [vmem:[%s164 + $0x18] sm:$0xff] %v437
        %443 = vst [vmem:[%s164 + $0x20] sm:$0xff] %v438
        %s444 = sand.u32 %s93, 1
        %s445 = scalar_lea.sflag [#allocation3], %s444
        %s446 = sand.u32 %s93, 1
        %s447 = smul.addr %s446, 40
        %s448 = scalar_lea.vmem [#allocation2], %s447
        // Predicated region
        $region33: #{tpu_custom_call.1} parent=31 // pred_check
          %p449 = pneg %p103
        $region34: #{tpu_custom_call.1} parent=31 // pred_check_branch
          %451 = sbr.rel (%p449) target = $region36
        $region35: #{tpu_custom_call.1} parent=31 // pred_region
          %s452 = smul.u32 5, %s17
          %454 = vsyncadd %s445, 0
          %s455 = smul.addr %s452, 8
          %s456 = scalar_lea.hbm %s3, %s455
          %s457 = sshll.u32 %s448, 4
          %s458 = int_to_ptr.vmem [resolvable:$true] %s457
          %s459 = sshll.u32 %s456, 4
          %s460 = int_to_ptr.hbm [resolvable:$true] %s459
          %465 = dma.vmem_to_hbm [thread:$0]  %s458, 640, %s460, %s445, 128, 128, 8
        $region36: #{tpu_custom_call.1} parent=31 // pred_fallthru
          _
      $region32: #{tpu_custom_call.1} parent=5 // pred_fallthru
        _
      %p466 = scmp.le.s32.totalorder 2, %s12
      // Predicated region
      $region37: #{tpu_custom_call.1} parent=5 // pred_check
        %p467 = pneg %p466
      $region38: #{tpu_custom_call.1} parent=5 // pred_check_branch
        %469 = sbr.rel (%p467) target = $region40
      $region39: #{tpu_custom_call.1} parent=5 // pred_region
        %s470 = ssub.s32 %s12, 2
        // Predicated region
        $region41: #{tpu_custom_call.1} parent=39 // pred_check
          %p471 = pneg %p109
        $region42: #{tpu_custom_call.1} parent=39 // pred_check_branch
          %473 = sbr.rel (%p471) target = $region44
        $region43: #{tpu_custom_call.1} parent=39 // pred_region
          %s474 = sand.u32 %s94, 1
          %s475 = scalar_lea.sflag [#allocation3], %s474
          %s476 = sand.u32 %s94, 1
          %s477 = smul.addr %s476, 40
          %s478 = scalar_lea.vmem [#allocation2], %s477
          %480 = dma.done %s475, 640
        $region44: #{tpu_custom_call.1} parent=39 // pred_fallthru
          _
      $region40: #{tpu_custom_call.1} parent=5 // pred_fallthru
        _
    $region6: #{tpu_custom_call.1} parent=1 // loop_footer
      %s16 = sadd.s32 1, %s12
    $region7: #{tpu_custom_call.1} parent=1 // loop_footer_branch
      %11 = sbr.rel target = $region3
    $region8: #{tpu_custom_call.1} parent=1 // loop_exit
      _
    %481 = vsyncpa [#allocation3], 1
    %s482 = scalar_lea.sflag [#allocation3], 1
    %483 = vsyncpa %s482, 1

</llo_original>
